<compile_context>
chip_gen: v7x
topology: tpu7x:2x2x1
jax: 0.10.0
libtpu: 0.0.40
codegen_flags: <defaults>
</compile_context>

<pallas_src>
import jax
import jax.numpy as jnp
from jax import lax
from jax.experimental import pallas as pl
from jax.experimental.pallas import tpu as pltpu


def _measure_kernel(re_ref, im_ref, out_ref):
    # re_ref, im_ref: (batch, rows, t_len) float32 VMEM blocks
    # out_ref:        (1, batch, rows)     float32
    b, r, t = re_ref.shape

    def chunk_sq(lo, size):
        rc = re_ref[:, :, pl.ds(lo, size)]
        ic = im_ref[:, :, pl.ds(lo, size)]
        return rc * rc + ic * ic

    if t % 128 == 0 and t > 128:
        n_chunks = t // 128
        if n_chunks <= 16:
            # Two independent accumulators break the serial VALU dependency
            # chain; per-chunk Ref loads keep vreg pressure bounded.
            acc0 = chunk_sq(0, 128)
            acc1 = chunk_sq(128, 128)
            for c in range(2, n_chunks):
                if c % 2 == 0:
                    acc0 = acc0 + chunk_sq(c * 128, 128)
                else:
                    acc1 = acc1 + chunk_sq(c * 128, 128)
            acc = acc0 + acc1
        else:
            def body(c, acc):
                return acc + chunk_sq(c * 128, 128)
            acc = lax.fori_loop(0, n_chunks, body,
                                jnp.zeros((b, r, 128), jnp.float32))
        row_sums = jnp.sum(acc, axis=-1)          # single cross-lane reduce
    else:
        # Small / non-128-multiple traced dims: load the whole block.
        row_sums = jnp.sum(chunk_sq(0, t), axis=-1)

    out_ref[0, :, :] = row_sums                   # (batch, rows), >= 0 by construction


def _pick_rows(batch, keep_dim, t_len, target_bytes=4 << 20):
    """Rows per grid step: as many as possible (fewest, biggest DMAs) while the
    per-input block (batch * rows * t_len * 4 B) stays under target_bytes.
    Result is always a power of two that is >= 8 (or == keep_dim if smaller),
    so the block layout is legal for any keep_dim."""
    rows = keep_dim
    while (rows > 8 and rows % 2 == 0 and (rows // 2) % 8 == 0
           and batch * rows * t_len * 4 > target_bytes):
        rows //= 2
    return rows


def measure_layer(real, imag, n_wires):
    """Pallas forward pass of MeasureLayer.

    real, imag: (batch, 2**n_wires, 2**n_traced) float32 state amplitudes
                (kept wires = major axis, traced wires = minor axis).
    Returns (batch, C(n_wires, 2)) float32 probabilities, in the same order as
    the PyTorch module's boolean mask.
    """
    assert n_wires >= 2, "MeasureLayer needs at least 2 measured wires"
    batch, keep_dim, t_len = real.shape
    assert keep_dim == 2 ** n_wires
    assert imag.shape == real.shape

    real = jnp.asarray(real, jnp.float32)
    imag = jnp.asarray(imag, jnp.float32)

    rows = _pick_rows(batch, keep_dim, t_len)
    groups = keep_dim // rows

    row_sums_gbr = pl.pallas_call(
        _measure_kernel,
        out_shape=jax.ShapeDtypeStruct((groups, batch, rows), jnp.float32),
        grid=(groups,),
        in_specs=[
            pl.BlockSpec((batch, rows, t_len), lambda j: (0, j, 0)),
            pl.BlockSpec((batch, rows, t_len), lambda j: (0, j, 0)),
        ],
        out_specs=pl.BlockSpec((1, batch, rows), lambda j: (j, 0, 0)),
        compiler_params=pltpu.CompilerParams(
            dimension_semantics=("parallel",),   # legal: per-group output block
            vmem_limit_bytes=48 << 20,
        ),
    )(real, imag)

    # (groups, batch, rows) -> (batch, 2**n_wires); tiny, done in the wrapper.
    diag = jnp.transpose(row_sums_gbr, (1, 0, 2)).reshape(batch, keep_dim)

    # Static Hamming-weight-2 mask, same ordering as the PyTorch module.
    mask_idx = jnp.asarray(
        [i for i in range(keep_dim) if bin(i).count("1") == 2], jnp.int32)
    # abs() on a sum of squares is a no-op but kept for exact parity.
    return jnp.abs(diag[:, mask_idx])


if __name__ == "__main__":
    n_wires = 4      # measured qubits -> 2**4 = 16 kept states, C(4,2) = 6 outputs
    n_traced = 9     # traced-out qubits -> 512 amplitudes per kept state
    batch = 2
    keep_dim, t_len = 2 ** n_wires, 2 ** n_traced

    key = jax.random.PRNGKey(0)
    kr, ki = jax.random.split(key)
    real = jax.random.normal(kr, (batch, keep_dim, t_len), dtype=jnp.float32)
    imag = jax.random.normal(ki, (batch, keep_dim, t_len), dtype=jnp.float32)
    # Normalize to a valid quantum state.
    norm = jnp.sqrt(jnp.sum(real * real + imag * imag, axis=(1, 2), keepdims=True))
    real = real / norm
    imag = imag / norm

    out = measure_layer(real, imag, n_wires)
    out = jax.block_until_ready(out)

    # Pure-JAX reference (mirrors the PyTorch forward).
    mask_idx = jnp.asarray(
        [i for i in range(keep_dim) if bin(i).count("1") == 2], jnp.int32)
    diag = jnp.sum(real * real + imag * imag, axis=-1)        # (batch, 2**n_wires)
    ref = jnp.abs(diag[:, mask_idx])

    assert out.shape == ref.shape == (batch, int(mask_idx.shape[0]))
    assert jnp.allclose(out, ref, rtol=1e-5, atol=1e-6), (out, ref)
    print("KERNEL_OK")
</pallas_src>

<mosaic_0001>
module attributes {stable_mosaic.version = 11 : i64} {
  func.func @_measure_kernel(%arg0: i32, %arg1: memref<2x16x512xf32, #tpu.memory_space<vmem>>, %arg2: memref<2x16x512xf32, #tpu.memory_space<vmem>>, %arg3: memref<1x2x16xf32, #tpu.memory_space<vmem>>) attributes {dimension_semantics = [#tpu.dimension_semantics<parallel>], iteration_bounds = array<i64: 1>, scalar_prefetch = 0 : i64, scratch_operands = 0 : i64, tpu.core_type = #tpu.core_type<tc>, window_params = [{transform_indices = @transform_0, window_bounds = array<i64: 2, 16, 512>}, {transform_indices = @transform_1, window_bounds = array<i64: 2, 16, 512>}, {transform_indices = @transform_2, window_bounds = array<i64: 1, 2, 16>}]} {
    %c0 = arith.constant 0 : index
    %c0_0 = arith.constant 0 : index
    %c0_1 = arith.constant 0 : index
    %0 = vector.load %arg1[%c0, %c0_0, %c0_1] : memref<2x16x512xf32, #tpu.memory_space<vmem>>, vector<2x16x128xf32>
    %c0_2 = arith.constant 0 : index
    %c0_3 = arith.constant 0 : index
    %c0_4 = arith.constant 0 : index
    %1 = vector.load %arg2[%c0_2, %c0_3, %c0_4] : memref<2x16x512xf32, #tpu.memory_space<vmem>>, vector<2x16x128xf32>
    %2 = arith.mulf %0, %0 : vector<2x16x128xf32>
    %3 = arith.mulf %1, %1 : vector<2x16x128xf32>
    %4 = arith.addf %2, %3 : vector<2x16x128xf32>
    %c0_5 = arith.constant 0 : index
    %c0_6 = arith.constant 0 : index
    %c128 = arith.constant 128 : index
    %5 = vector.load %arg1[%c0_5, %c0_6, %c128] : memref<2x16x512xf32, #tpu.memory_space<vmem>>, vector<2x16x128xf32>
    %c0_7 = arith.constant 0 : index
    %c0_8 = arith.constant 0 : index
    %c128_9 = arith.constant 128 : index
    %6 = vector.load %arg2[%c0_7, %c0_8, %c128_9] : memref<2x16x512xf32, #tpu.memory_space<vmem>>, vector<2x16x128xf32>
    %7 = arith.mulf %5, %5 : vector<2x16x128xf32>
    %8 = arith.mulf %6, %6 : vector<2x16x128xf32>
    %9 = arith.addf %7, %8 : vector<2x16x128xf32>
    %c0_10 = arith.constant 0 : index
    %c0_11 = arith.constant 0 : index
    %c256 = arith.constant 256 : index
    %10 = vector.load %arg1[%c0_10, %c0_11, %c256] : memref<2x16x512xf32, #tpu.memory_space<vmem>>, vector<2x16x128xf32>
    %c0_12 = arith.constant 0 : index
    %c0_13 = arith.constant 0 : index
    %c256_14 = arith.constant 256 : index
    %11 = vector.load %arg2[%c0_12, %c0_13, %c256_14] : memref<2x16x512xf32, #tpu.memory_space<vmem>>, vector<2x16x128xf32>
    %12 = arith.mulf %10, %10 : vector<2x16x128xf32>
    %13 = arith.mulf %11, %11 : vector<2x16x128xf32>
    %14 = arith.addf %12, %13 : vector<2x16x128xf32>
    %15 = arith.addf %4, %14 : vector<2x16x128xf32>
    %c0_15 = arith.constant 0 : index
    %c0_16 = arith.constant 0 : index
    %c384 = arith.constant 384 : index
    %16 = vector.load %arg1[%c0_15, %c0_16, %c384] : memref<2x16x512xf32, #tpu.memory_space<vmem>>, vector<2x16x128xf32>
    %c0_17 = arith.constant 0 : index
    %c0_18 = arith.constant 0 : index
    %c384_19 = arith.constant 384 : index
    %17 = vector.load %arg2[%c0_17, %c0_18, %c384_19] : memref<2x16x512xf32, #tpu.memory_space<vmem>>, vector<2x16x128xf32>
    %18 = arith.mulf %16, %16 : vector<2x16x128xf32>
    %19 = arith.mulf %17, %17 : vector<2x16x128xf32>
    %20 = arith.addf %18, %19 : vector<2x16x128xf32>
    %21 = arith.addf %9, %20 : vector<2x16x128xf32>
    %22 = arith.addf %15, %21 : vector<2x16x128xf32>
    %cst = arith.constant dense<0.000000e+00> : vector<2x16xf32>
    %23 = vector.multi_reduction <add>, %22, %cst [2] : vector<2x16x128xf32> to vector<2x16xf32>
    %c0_20 = arith.constant 0 : index
    %c0_21 = arith.constant 0 : index
    %c0_22 = arith.constant 0 : index
    %24 = vector.load %arg3[%c0_20, %c0_21, %c0_22] : memref<1x2x16xf32, #tpu.memory_space<vmem>>, vector<1x2x16xf32>
    %25 = vector.shape_cast %24 : vector<1x2x16xf32> to vector<2x16xf32>
    %26 = vector.shape_cast %23 : vector<2x16xf32> to vector<1x2x16xf32>
    tpu.vector_store %arg3[%c0_20, %c0_21, %c0_22], %26 {strides = array<i32>} : memref<1x2x16xf32, #tpu.memory_space<vmem>>, vector<1x2x16xf32>,
    return
  }
  func.func @transform_0(%arg0: i32) -> (i32, i32, i32) {
    %c0_i32 = arith.constant 0 : i32
    %c0_i32_0 = arith.constant 0 : i32
    %c0_i32_1 = arith.constant 0 : i32
    return %c0_i32, %arg0, %c0_i32_0 : i32, i32, i32
  }
  func.func @transform_1(%arg0: i32) -> (i32, i32, i32) {
    %c0_i32 = arith.constant 0 : i32
    %c0_i32_0 = arith.constant 0 : i32
    %c0_i32_1 = arith.constant 0 : i32
    return %c0_i32, %arg0, %c0_i32_0 : i32, i32, i32
  }
  func.func @transform_2(%arg0: i32) -> (i32, i32, i32) {
    %c0_i32 = arith.constant 0 : i32
    %c0_i32_0 = arith.constant 0 : i32
    %c0_i32_1 = arith.constant 0 : i32
    return %arg0, %c0_i32, %c0_i32_0 : i32, i32, i32
  }
}

</mosaic_0001>

<llo_original>
// kernel: tpu_custom_call.1
$region0: #{tpu_custom_call.1}
  #allocation0 [shape = 'u32[]', space=smem, size = 0x4, offset = 0x4, fixed_abs, tag = 'smem constant byte address 0x4 - core index']
  #allocation1 [shape = 'u32[144,128]{1,0:T(1,128)}', space=vmem, size = 0x12000, scoped, tag = 'internal scratch']
  %s0 = inlined_call_operand.hbm [shape: f32[2,16,512], index: 0, kind: input, shape index: {}]
  %s1 = inlined_call_operand.hbm [shape: f32[2,16,512], index: 1, kind: input, shape index: {}]
  %s2 = inlined_call_operand.hbm [shape: f32[1,2,16], index: 2, kind: output, shape index: {}]
  %s3 = sld [smem:[#allocation0]]
  $region26: #{tpu_custom_call.1} parent=0
    _
  %s5 = ssub.s32 1, %s3
  %s6 = scalar_select 0, %s5, %s3
  $region1: #{tpu_custom_call.1} parent=0
    #allocation2 [shape = 'u8[65536]{0}', space=vmem, size = 0x10000, scoped, tag = 'input window, operand 0, single buffered']
    #allocation3 [shape = 's32[1]{0}', space=sflag, size = 0x4, scoped, tag = 'scoped memory for tpu_custom_call.1']
    #allocation4 [shape = 's32[1]{0}', space=sflag, size = 0x4, scoped, tag = 'scoped memory for tpu_custom_call.1']
    #allocation5 [shape = 'u8[65536]{0}', space=vmem, size = 0x10000, scoped, tag = 'input window, operand 1, single buffered']
    #allocation6 [shape = 's32[1]{0}', space=sflag, size = 0x4, scoped, tag = 'scoped memory for tpu_custom_call.1']
    #allocation7 [shape = 'u8[1024]{0}', space=vmem, size = 0x400, scoped, tag = 'output window, operand 0, single buffered']
    %7 = vsyncpa [#allocation3], 0
    %8 = vsyncpa [#allocation6], 0
    %9 = vsyncpa [#allocation4], 0
    // Predicated region
    $region2: #{tpu_custom_call.1} parent=1 // pred_check
      _
    $region3: #{tpu_custom_call.1} parent=1 // pred_check_branch
      %11 = sbr.rel (0) target = $region5
    $region4: #{tpu_custom_call.1} parent=1 // pred_region
      %s13 = ssub.s32 2048, 2048
      %14 = vsyncadd [#allocation3], %s13
      %s15 = sshll.u32 [#allocation2], 4
      %s16 = int_to_ptr.vmem [resolvable:$true] %s15
      %21 = dma.hbm_to_vmem [thread:$0]  %s0, 2048, %s16, [#allocation3], 512, 512, 32
    $region5: #{tpu_custom_call.1} parent=1 // pred_fallthru
      _
    // Predicated region
    $region6: #{tpu_custom_call.1} parent=1 // pred_check
      _
    $region7: #{tpu_custom_call.1} parent=1 // pred_check_branch
      %23 = sbr.rel (0) target = $region9
    $region8: #{tpu_custom_call.1} parent=1 // pred_region
      %s25 = ssub.s32 2048, 2048
      %26 = vsyncadd [#allocation6], %s25
      %s27 = sshll.u32 [#allocation5], 4
      %s28 = int_to_ptr.vmem [resolvable:$true] %s27
      %33 = dma.hbm_to_vmem [thread:$0]  %s1, 2048, %s28, [#allocation6], 512, 512, 32
    $region9: #{tpu_custom_call.1} parent=1 // pred_fallthru
      _
    // Predicated region
    $region10: #{tpu_custom_call.1} parent=1 // pred_check
      _
    $region11: #{tpu_custom_call.1} parent=1 // pred_check_branch
      %35 = sbr.rel (0) target = $region13
    $region12: #{tpu_custom_call.1} parent=1 // pred_region
      %36 = dma.done [#allocation3], 2048
    $region13: #{tpu_custom_call.1} parent=1 // pred_fallthru
      _
    // Predicated region
    $region14: #{tpu_custom_call.1} parent=1 // pred_check
      _
    $region15: #{tpu_custom_call.1} parent=1 // pred_check_branch
      %38 = sbr.rel (0) target = $region17
    $region16: #{tpu_custom_call.1} parent=1 // pred_region
      %39 = dma.done [#allocation6], 2048
    $region17: #{tpu_custom_call.1} parent=1 // pred_fallthru
      _
    %v40 = vld [vmem:[#allocation2] sm:$0xff]
    %v41 = vld [vmem:[#allocation2 + $0x20] sm:$0xff]
    %v42 = vld [vmem:[#allocation2 + $0x40] sm:$0xff]
    %v43 = vld [vmem:[#allocation2 + $0x60] sm:$0xff]
    %v44 = vld [vmem:[#allocation5] sm:$0xff]
    %v45 = vld [vmem:[#allocation5 + $0x20] sm:$0xff]
    %v46 = vld [vmem:[#allocation5 + $0x40] sm:$0xff]
    %v47 = vld [vmem:[#allocation5 + $0x60] sm:$0xff]
    %v48 = vmul.f32 %v40, %v40
    %v49 = vmul.f32 %v41, %v41
    %v50 = vmul.f32 %v42, %v42
    %v51 = vmul.f32 %v43, %v43
    %v52 = vmul.f32 %v44, %v44
    %v53 = vmul.f32 %v45, %v45
    %v54 = vmul.f32 %v46, %v46
    %v55 = vmul.f32 %v47, %v47
    %v56 = vadd.f32 %v48, %v52
    %v57 = vadd.f32 %v49, %v53
    %v58 = vadd.f32 %v50, %v54
    %v59 = vadd.f32 %v51, %v55
    %v60 = vld [vmem:[#allocation2 + $0x8] sm:$0xff]
    %v61 = vld [vmem:[#allocation2 + $0x28] sm:$0xff]
    %v62 = vld [vmem:[#allocation2 + $0x48] sm:$0xff]
    %v63 = vld [vmem:[#allocation2 + $0x68] sm:$0xff]
    %v64 = vld [vmem:[#allocation5 + $0x8] sm:$0xff]
    %v65 = vld [vmem:[#allocation5 + $0x28] sm:$0xff]
    %v66 = vld [vmem:[#allocation5 + $0x48] sm:$0xff]
    %v67 = vld [vmem:[#allocation5 + $0x68] sm:$0xff]
    %v68 = vmul.f32 %v60, %v60
    %v69 = vmul.f32 %v61, %v61
    %v70 = vmul.f32 %v62, %v62
    %v71 = vmul.f32 %v63, %v63
    %v72 = vmul.f32 %v64, %v64
    %v73 = vmul.f32 %v65, %v65
    %v74 = vmul.f32 %v66, %v66
    %v75 = vmul.f32 %v67, %v67
    %v76 = vadd.f32 %v68, %v72
    %v77 = vadd.f32 %v69, %v73
    %v78 = vadd.f32 %v70, %v74
    %v79 = vadd.f32 %v71, %v75
    %v80 = vld [vmem:[#allocation2 + $0x10] sm:$0xff]
    %v81 = vld [vmem:[#allocation2 + $0x30] sm:$0xff]
    %v82 = vld [vmem:[#allocation2 + $0x50] sm:$0xff]
    %v83 = vld [vmem:[#allocation2 + $0x70] sm:$0xff]
    %v84 = vld [vmem:[#allocation5 + $0x10] sm:$0xff]
    %v85 = vld [vmem:[#allocation5 + $0x30] sm:$0xff]
    %v86 = vld [vmem:[#allocation5 + $0x50] sm:$0xff]
    %v87 = vld [vmem:[#allocation5 + $0x70] sm:$0xff]
    %v88 = vmul.f32 %v80, %v80
    %v89 = vmul.f32 %v81, %v81
    %v90 = vmul.f32 %v82, %v82
    %v91 = vmul.f32 %v83, %v83
    %v92 = vmul.f32 %v84, %v84
    %v93 = vmul.f32 %v85, %v85
    %v94 = vmul.f32 %v86, %v86
    %v95 = vmul.f32 %v87, %v87
    %v96 = vadd.f32 %v88, %v92
    %v97 = vadd.f32 %v89, %v93
    %v98 = vadd.f32 %v90, %v94
    %v99 = vadd.f32 %v91, %v95
    %v100 = vadd.f32 %v56, %v96
    %v101 = vadd.f32 %v57, %v97
    %v102 = vadd.f32 %v58, %v98
    %v103 = vadd.f32 %v59, %v99
    %v104 = vld [vmem:[#allocation2 + $0x18] sm:$0xff]
    %v105 = vld [vmem:[#allocation2 + $0x38] sm:$0xff]
    %v106 = vld [vmem:[#allocation2 + $0x58] sm:$0xff]
    %v107 = vld [vmem:[#allocation2 + $0x78] sm:$0xff]
    %v108 = vld [vmem:[#allocation5 + $0x18] sm:$0xff]
    %v109 = vld [vmem:[#allocation5 + $0x38] sm:$0xff]
    %v110 = vld [vmem:[#allocation5 + $0x58] sm:$0xff]
    %v111 = vld [vmem:[#allocation5 + $0x78] sm:$0xff]
    %v112 = vmul.f32 %v104, %v104
    %v113 = vmul.f32 %v105, %v105
    %v114 = vmul.f32 %v106, %v106
    %v115 = vmul.f32 %v107, %v107
    %v116 = vmul.f32 %v108, %v108
    %v117 = vmul.f32 %v109, %v109
    %v118 = vmul.f32 %v110, %v110
    %v119 = vmul.f32 %v111, %v111
    %v120 = vadd.f32 %v112, %v116
    %v121 = vadd.f32 %v113, %v117
    %v122 = vadd.f32 %v114, %v118
    %v123 = vadd.f32 %v115, %v119
    %v124 = vadd.f32 %v76, %v120
    %v125 = vadd.f32 %v77, %v121
    %v126 = vadd.f32 %v78, %v122
    %v127 = vadd.f32 %v79, %v123
    %v128 = vadd.f32 %v100, %v124
    %v129 = vadd.f32 %v101, %v125
    %v130 = vadd.f32 %v102, %v126
    %v131 = vadd.f32 %v103, %v127
    %132 = vadd.xlane.f32.xlu0 %v128
    %v133 = vpop.xlane.xlu0 %132
    %134 = vadd.xlane.f32.xlu0 %v129
    %v135 = vpop.xlane.xlu0 %134
    %136 = vadd.xlane.f32.xlu0 %v130
    %v137 = vpop.xlane.xlu0 %136
    %138 = vadd.xlane.f32.xlu0 %v131
    %v139 = vpop.xlane.xlu0 %138
    %v144 = vlaneseq
    %v145 = vand.u32 %v144, 127
    %v146 = vlaneseq
    %v147 = vshrl.u32 %v146, 7
    %v148 = vsub.s32 %v145, %v147
    %v149 = vrot.slane %v133, %v148
    %v150 = vadd.s32 %v145, 4294967288
    %v151 = vlaneseq
    %v152 = vshrl.u32 %v151, 7
    %v153 = vsub.s32 %v150, %v152
    %v154 = vrot.slane %v135, %v153
    %vm155 = vcmask 130112
    %v156 = vsel %vm155, %v154, %v149
    %v157 = vlaneseq
    %v158 = vshrl.u32 %v157, 7
    %v159 = vsub.s32 %v145, %v158
    %v160 = vrot.slane %v137, %v159
    %v161 = vlaneseq
    %v162 = vshrl.u32 %v161, 7
    %v163 = vsub.s32 %v150, %v162
    %v164 = vrot.slane %v139, %v163
    %v165 = vsel %vm155, %v164, %v160
    %vm166 = vcmask 1041409
    %v167 = vsel %vm166, %v165, %v156
    %vm169 = vcmask 123904
    %170 = vst.msk [vmem:[#allocation7] sm:$0x3] %vm169, %v167
    // Predicated region
    $region18: #{tpu_custom_call.1} parent=1 // pred_check
      _
    $region19: #{tpu_custom_call.1} parent=1 // pred_check_branch
      %172 = sbr.rel (0) target = $region21
    $region20: #{tpu_custom_call.1} parent=1 // pred_region
      %s174 = ssub.s32 32, 32
      %175 = vsyncadd [#allocation4], %s174
      %s177 = sshll.u32 [#allocation7], 4
      %s178 = int_to_ptr.vmem [resolvable:$true] %s177
      %180 = dma.vmem_to_hbm [thread:$0]  %s178, 32, %s2, [#allocation4]
    $region21: #{tpu_custom_call.1} parent=1 // pred_fallthru
      _
    // Predicated region
    $region22: #{tpu_custom_call.1} parent=1 // pred_check
      _
    $region23: #{tpu_custom_call.1} parent=1 // pred_check_branch
      %182 = sbr.rel (0) target = $region25
    $region24: #{tpu_custom_call.1} parent=1 // pred_region
      %183 = dma.done [#allocation4], 32
    $region25: #{tpu_custom_call.1} parent=1 // pred_fallthru
      _
    %184 = vsyncpa [#allocation3], 1
    %185 = vsyncpa [#allocation6], 1
    %186 = vsyncpa [#allocation4], 1

</llo_original>
